<compile_context>
chip_gen: v6e
topology: v6e:2x2x1
jax: 0.10.0
libtpu: 0.0.40
codegen_flags: <defaults>
</compile_context>

<pallas_src>
import functools

import numpy as np
import jax
import jax.numpy as jnp
from jax.experimental import pallas as pl
from jax.experimental.pallas import tpu as pltpu

_LANE = 128
_MAX_ROW_TILE = 512  # rows per grid step; 3*512*128*4B*2buf ~= 1.5 MiB VMEM


# ------------------------------------------------------------------ kernel ---
def _mse_evs_kernel(x_ref, out_ref, acc_ref, *, inv_total):
    # x_ref:   (3, TR, 128) packed [pred_re, pred_im, true]
    # acc_ref: (1, 128) per-lane partial sums (VMEM scratch, lives across grid)
    i = pl.program_id(0)

    @pl.when(i == 0)
    def _():
        acc_ref[...] = jnp.zeros_like(acc_ref)

    re = x_ref[0]
    im = x_ref[1]
    tru = x_ref[2]

    # get_magnitude(get_eigenvalues(...)) -> |lambda|
    mag = jnp.sqrt(re * re + im * im)
    diff = mag - tru
    # mask = diff > 0 ; diff[mask] *= 2   ==   diff + max(diff, 0)
    diff = diff + jnp.maximum(diff, 0.0)
    # per-lane partial sum of squares (sublane reduce -> XLU slot, VPU stays free)
    acc_ref[...] += jnp.sum(diff * diff, axis=0, keepdims=True)

    @pl.when(i == pl.num_programs(0) - 1)
    def _():
        # single cross-lane reduce + fold the mean in-kernel (no downstream divide)
        out_ref[...] = (jnp.sum(acc_ref[...]) * inv_total).reshape(1, 1)


# ----------------------------------------------------------------- wrappers ---
def _pack_lane_dense(ev_real, ev_imag, evs_true):
    """Host-side pack of three equal-size float arrays into one zero-padded
    lane-dense [3, rows_padded, 128] float32 array (single H2D transfer).

    Returns (packed, row_tile, total_elements)."""
    re = np.asarray(ev_real, dtype=np.float32).reshape(-1)
    im = np.asarray(ev_imag, dtype=np.float32).reshape(-1)
    tr = np.asarray(evs_true, dtype=np.float32).reshape(-1)
    total = re.size
    rows = -(-total // _LANE)                                   # ceil
    if rows >= _MAX_ROW_TILE:
        row_tile = _MAX_ROW_TILE
    else:
        row_tile = max(8, -(-rows // 8) * 8)                    # 8-row aligned
    rows_padded = -(-rows // row_tile) * row_tile
    packed = np.zeros((3, rows_padded * _LANE), dtype=np.float32)
    packed[0, :total] = re
    packed[1, :total] = im
    packed[2, :total] = tr
    return packed.reshape(3, rows_padded, _LANE), row_tile, total


def mse_evs_pallas(packed, row_tile, total):
    """packed: [3, rows_padded, 128] float32 (host numpy or jnp). Returns scalar MSE."""
    _, rows_padded, lane = packed.shape
    num_tiles = rows_padded // row_tile
    kernel = functools.partial(_mse_evs_kernel, inv_total=1.0 / float(total))
    out = pl.pallas_call(
        kernel,
        out_shape=jax.ShapeDtypeStruct((1, 1), jnp.float32),
        grid=(num_tiles,),
        in_specs=[pl.BlockSpec((3, row_tile, lane), lambda i: (0, i, 0))],
        out_specs=pl.BlockSpec((1, 1), lambda i: (0, 0)),
        scratch_shapes=[pltpu.VMEM((1, lane), jnp.float32)],
        compiler_params=pltpu.CompilerParams(
            dimension_semantics=("arbitrary",)),   # reduction axis (shared acc/out)
    )(jnp.asarray(packed))
    return out[0, 0]


# ------------------------------------------------------------- module glue ---
class MSEEvsModJax:
    """JAX/Pallas re-implementation of PyRES MSE_evs_mod (forward pass)."""

    def __init__(self, iter_num, freq_points, samplerate, lowest_f, highest_f,
                 key):
        assert lowest_f >= 0
        nyquist = samplerate // 2
        assert highest_f <= nyquist
        min_fp = int(lowest_f / nyquist * freq_points)
        max_fp = int(highest_f / nyquist * freq_points)
        self.freq_points = max_fp - min_fp
        self.max_index = self.freq_points
        self.iter_num = iter_num
        # deterministic stand-in for torch.randperm
        perm = np.asarray(jax.random.permutation(key, self.freq_points))
        self.idxs = perm + min_fp
        self.evs_per_iteration = float(np.ceil(self.freq_points / self.iter_num))
        self.interval_count = 0

    def _get_indexes(self):
        idx1 = min(int(self.interval_count * self.evs_per_iteration),
                   self.max_index - 1)
        idx2 = min(int((self.interval_count + 1) * self.evs_per_iteration),
                   self.max_index)
        idxs = self.idxs[np.arange(idx1, idx2, dtype=np.int64)]
        self.interval_count = (self.interval_count + 1) % self.iter_num
        return idxs

    def __call__(self, y_pred, y_true):
        # y_pred: [B, F, N, N] complex ; y_true: [B, F, N] float
        idxs = self._get_indexes()
        sub = np.asarray(y_pred)[:, idxs, :, :]
        # TODO(synk): general non-Hermitian complex eigendecomposition has no
        # Pallas/TPU equivalent; computed on host with numpy (glue).
        evs = np.linalg.eigvals(sub)                          # [B, F_sel, N] complex
        evs_true = np.asarray(y_true)[:, idxs, :]
        packed, row_tile, total = _pack_lane_dense(evs.real, evs.imag, evs_true)
        return mse_evs_pallas(packed, row_tile, total)


# -------------------------------------------------------------------- main ---
if __name__ == "__main__":
    key = jax.random.PRNGKey(0)
    k_perm, k_pr, k_pi, k_t = jax.random.split(key, 4)

    # small shapes consistent with the module
    B, FREQ_POINTS, N = 2, 16, 4
    ITER_NUM, SAMPLERATE = 4, 48000
    LOWEST_F, HIGHEST_F = 0.0, 24000.0

    loss_mod = MSEEvsModJax(ITER_NUM, FREQ_POINTS, SAMPLERATE,
                            LOWEST_F, HIGHEST_F, k_perm)

    y_pred_re = jax.random.normal(k_pr, (B, FREQ_POINTS, N, N), jnp.float32)
    y_pred_im = jax.random.normal(k_pi, (B, FREQ_POINTS, N, N), jnp.float32)
    y_pred = np.asarray(y_pred_re) + 1j * np.asarray(y_pred_im)   # complex
    y_true = jax.random.normal(k_t, (B, FREQ_POINTS, N), jnp.float32)

    out = loss_mod(y_pred, y_true)
    out = jax.block_until_ready(out)

    # reference check (pure numpy) of the post-eigendecomposition math
    ref_mod = MSEEvsModJax(ITER_NUM, FREQ_POINTS, SAMPLERATE,
                           LOWEST_F, HIGHEST_F, k_perm)
    idxs_ref = ref_mod._get_indexes()
    evs_ref = np.abs(np.linalg.eigvals(np.asarray(y_pred)[:, idxs_ref, :, :]))
    diff_ref = evs_ref - np.asarray(y_true)[:, idxs_ref, :]
    diff_ref = np.where(diff_ref > 0.0, diff_ref * 2.0, diff_ref)
    mse_ref = np.mean(np.square(np.abs(diff_ref)))
    np.testing.assert_allclose(np.asarray(out), mse_ref, rtol=1e-4, atol=1e-5)

    print("KERNEL_OK")
</pallas_src>

<mosaic_0001>
module attributes {stable_mosaic.version = 11 : i64} {
  func.func @_mse_evs_kernel(%arg0: i32, %arg1: memref<3x8x128xf32, #tpu.memory_space<vmem>>, %arg2: memref<1x1xf32, #tpu.memory_space<vmem>>, %arg3: memref<1x128xf32, #tpu.memory_space<vmem>>) attributes {dimension_semantics = [#tpu.dimension_semantics<arbitrary>], iteration_bounds = array<i64: 1>, scalar_prefetch = 0 : i64, scratch_operands = 1 : i64, tpu.core_type = #tpu.core_type<tc>, window_params = [{transform_indices = @transform_0, window_bounds = array<i64: 3, 8, 128>}, {pipeline_mode = #tpu.pipeline_mode<synchronous>, transform_indices = @transform_1, window_bounds = array<i64: 1, 1>}]} {
    %c0_i32 = arith.constant 0 : i32
    %0 = arith.cmpi eq, %arg0, %c0_i32 : i32
    %1 = arith.extui %0 : i1 to i32
    %c0_i32_0 = arith.constant 0 : i32
    %2 = arith.cmpi ne, %1, %c0_i32_0 : i32
    scf.if %2 {
      %cst_14 = arith.constant 0.000000e+00 : f32
      %26 = vector.broadcast %cst_14 : f32 to vector<1x128xf32>
      %c0_15 = arith.constant 0 : index
      %c0_16 = arith.constant 0 : index
      %27 = vector.load %arg3[%c0_15, %c0_16] : memref<1x128xf32, #tpu.memory_space<vmem>>, vector<1x128xf32>
      tpu.vector_store %arg3[%c0_15, %c0_16], %26 {strides = array<i32>} : memref<1x128xf32, #tpu.memory_space<vmem>>, vector<1x128xf32>,
    } else {
    }
    %c0 = arith.constant 0 : index
    %c0_1 = arith.constant 0 : index
    %c0_2 = arith.constant 0 : index
    %3 = vector.load %arg1[%c0, %c0_1, %c0_2] : memref<3x8x128xf32, #tpu.memory_space<vmem>>, vector<1x8x128xf32>
    %4 = vector.shape_cast %3 : vector<1x8x128xf32> to vector<8x128xf32>
    %c1 = arith.constant 1 : index
    %c0_3 = arith.constant 0 : index
    %c0_4 = arith.constant 0 : index
    %5 = vector.load %arg1[%c1, %c0_3, %c0_4] : memref<3x8x128xf32, #tpu.memory_space<vmem>>, vector<1x8x128xf32>
    %6 = vector.shape_cast %5 : vector<1x8x128xf32> to vector<8x128xf32>
    %c2 = arith.constant 2 : index
    %c0_5 = arith.constant 0 : index
    %c0_6 = arith.constant 0 : index
    %7 = vector.load %arg1[%c2, %c0_5, %c0_6] : memref<3x8x128xf32, #tpu.memory_space<vmem>>, vector<1x8x128xf32>
    %8 = vector.shape_cast %7 : vector<1x8x128xf32> to vector<8x128xf32>
    %9 = arith.mulf %4, %4 : vector<8x128xf32>
    %10 = arith.mulf %6, %6 : vector<8x128xf32>
    %11 = arith.addf %9, %10 : vector<8x128xf32>
    %12 = math.sqrt %11 : vector<8x128xf32>
    %13 = arith.subf %12, %8 : vector<8x128xf32>
    %cst = arith.constant 0.000000e+00 : f32
    %14 = vector.broadcast %cst : f32 to vector<8x128xf32>
    %15 = arith.maximumf %13, %14 : vector<8x128xf32>
    %16 = arith.addf %13, %15 : vector<8x128xf32>
    %c0_7 = arith.constant 0 : index
    %c0_8 = arith.constant 0 : index
    %17 = vector.load %arg3[%c0_7, %c0_8] : memref<1x128xf32, #tpu.memory_space<vmem>>, vector<1x128xf32>
    %18 = arith.mulf %16, %16 : vector<8x128xf32>
    %cst_9 = arith.constant dense<0.000000e+00> : vector<128xf32>
    %19 = vector.multi_reduction <add>, %18, %cst_9 [0] : vector<8x128xf32> to vector<128xf32>
    %20 = vector.shape_cast %19 : vector<128xf32> to vector<1x128xf32>
    %21 = arith.addf %17, %20 : vector<1x128xf32>
    %c0_10 = arith.constant 0 : index
    %c0_11 = arith.constant 0 : index
    %22 = vector.load %arg3[%c0_10, %c0_11] : memref<1x128xf32, #tpu.memory_space<vmem>>, vector<1x128xf32>
    tpu.vector_store %arg3[%c0_10, %c0_11], %21 {strides = array<i32>} : memref<1x128xf32, #tpu.memory_space<vmem>>, vector<1x128xf32>,
    %c0_i32_12 = arith.constant 0 : i32
    %23 = arith.cmpi eq, %arg0, %c0_i32_12 : i32
    %24 = arith.extui %23 : i1 to i32
    %c0_i32_13 = arith.constant 0 : i32
    %25 = arith.cmpi ne, %24, %c0_i32_13 : i32
    scf.if %25 {
      %c0_14 = arith.constant 0 : index
      %c0_15 = arith.constant 0 : index
      %26 = vector.load %arg3[%c0_14, %c0_15] : memref<1x128xf32, #tpu.memory_space<vmem>>, vector<1x128xf32>
      %27 = vector.shape_cast %26 : vector<1x128xf32> to vector<1x1x128xf32>
      %cst_16 = arith.constant dense<0.000000e+00> : vector<1xf32>
      %28 = vector.multi_reduction <add>, %27, %cst_16 [1, 2] : vector<1x1x128xf32> to vector<1xf32>
      %29 = vector.shape_cast %28 : vector<1xf32> to vector<1x1x1xf32>
      %30 = vector.extract %29[0, 0, 0] : f32 from vector<1x1x1xf32>
      %cst_17 = arith.constant 3.125000e-02 : f32
      %31 = arith.mulf %30, %cst_17 : f32
      %32 = vector.broadcast %31 : f32 to vector<1x1xf32>
      %c0_18 = arith.constant 0 : index
      %c0_19 = arith.constant 0 : index
      %33 = vector.load %arg2[%c0_18, %c0_19] : memref<1x1xf32, #tpu.memory_space<vmem>>, vector<1x1xf32>
      tpu.vector_store %arg2[%c0_18, %c0_19], %32 {strides = array<i32>} : memref<1x1xf32, #tpu.memory_space<vmem>>, vector<1x1xf32>,
    } else {
    }
    return
  }
  func.func @transform_0(%arg0: i32) -> (i32, i32, i32) {
    %c0_i32 = arith.constant 0 : i32
    %c0_i32_0 = arith.constant 0 : i32
    %c0_i32_1 = arith.constant 0 : i32
    return %c0_i32, %arg0, %c0_i32_0 : i32, i32, i32
  }
  func.func @transform_1(%arg0: i32) -> (i32, i32) {
    %c0_i32 = arith.constant 0 : i32
    %c0_i32_0 = arith.constant 0 : i32
    %c0_i32_1 = arith.constant 0 : i32
    return %c0_i32, %c0_i32_0 : i32, i32
  }
}

</mosaic_0001>

<llo_original>
// kernel: tpu_custom_call.1
$region0: #{tpu_custom_call.1}
  #allocation0 [shape = 'u32[]', space=smem, size = 0x4, offset = 0x4, fixed_abs, tag = 'smem constant byte address 0x4 - core index']
  #allocation1 [shape = 'u32[144,128]{1,0:T(1,128)}', space=vmem, size = 0x12000, scoped, tag = 'internal scratch']
  #allocation2 [shape = 'f32[1,128]{1,0:T(1,128)}', space=vmem, size = 0x200, scoped, tag = 'scratch operand']
  %s0 = inlined_call_operand.hbm [shape: f32[3,8,128], index: 0, kind: input, shape index: {}]
  %s1 = inlined_call_operand.hbm [shape: f32[1,1], index: 1, kind: output, shape index: {}]
  %s2 = sld [smem:[#allocation0]]
  $region26: #{tpu_custom_call.1} parent=0
    _
  %s4 = ssub.s32 1, %s2
  %s5 = scalar_select 0, %s4, %s2
  $region1: #{tpu_custom_call.1} parent=0
    #allocation3 [shape = 'u8[12288]{0}', space=vmem, size = 0x3000, scoped, tag = 'input window, operand 0, single buffered']
    #allocation4 [shape = 's32[1]{0}', space=sflag, size = 0x4, scoped, tag = 'scoped memory for tpu_custom_call.1']
    #allocation5 [shape = 's32[1]{0}', space=sflag, size = 0x4, scoped, tag = 'scoped memory for tpu_custom_call.1']
    #allocation6 [shape = 'u8[512]{0}', space=vmem, size = 0x400, scoped, tag = 'output window, operand 0, single buffered']
    %6 = vsyncpa [#allocation4], 0
    %7 = vsyncpa [#allocation5], 0
    // Predicated region
    $region2: #{tpu_custom_call.1} parent=1 // pred_check
      _
    $region3: #{tpu_custom_call.1} parent=1 // pred_check_branch
      %9 = sbr.rel (0) target = $region5
    $region4: #{tpu_custom_call.1} parent=1 // pred_region
      %s11 = ssub.s32 384, 384
      %12 = vsyncadd [#allocation4], %s11
      %s13 = sshll.u32 [#allocation3], 4
      %s14 = int_to_ptr.vmem [resolvable:$true] %s13
      %19 = dma.hbm_to_vmem [thread:$0]  %s0, 384, %s14, [#allocation4], 128, 128, 8
    $region5: #{tpu_custom_call.1} parent=1 // pred_fallthru
      _
    // Predicated region
    $region6: #{tpu_custom_call.1} parent=1 // pred_check
      _
    $region7: #{tpu_custom_call.1} parent=1 // pred_check_branch
      %21 = sbr.rel (0) target = $region9
    $region8: #{tpu_custom_call.1} parent=1 // pred_region
      %22 = dma.done [#allocation4], 384
    $region9: #{tpu_custom_call.1} parent=1 // pred_fallthru
      _
    %p23 = scmp.eq.s32.totalorder 0, 0
    // Predicated region
    $region10: #{tpu_custom_call.1} parent=1 // pred_check
      %p24 = pneg %p23
    $region11: #{tpu_custom_call.1} parent=1 // pred_check_branch
      %26 = sbr.rel (%p24) target = $region13
    $region12: #{tpu_custom_call.1} parent=1 // pred_region
      %27 = vst [vmem:[#allocation2] sm:$0x1] 0.0
    $region13: #{tpu_custom_call.1} parent=1 // pred_fallthru
      _
    %v28 = vld [vmem:[#allocation3] sm:$0xff]
    %s29 = scalar_lea.vmem [#allocation3], 8
    %v30 = vld [vmem:[%s29] sm:$0xff]
    %s31 = scalar_lea.vmem [#allocation3], 16
    %v32 = vld [vmem:[%s31] sm:$0xff]
    %v33 = vmul.f32 %v28, %v28
    %v34 = vmul.f32 %v30, %v30
    %v35 = vadd.f32 %v33, %v34
    %v36 = vrsqrt.pop %v35
    %v37 = vmul.f32 %v35, %v36
    %vm38 = vcmp.eq.f32.partialorder %v35, inf
    %v39 = vsel %vm38, %v35, %v37
    %vm40 = vcmp.eq.f32.partialorder %v35, 0.0
    %v41 = vand.u32 %v35, 2147483648
    %v42 = vsel %vm40, %v41, %v39
    %v43 = vsub.f32 %v42, %v32
    %v44 = vmax.f32 %v43, 0.0
    %v45 = vadd.f32 %v43, %v44
    %v46 = vld [vmem:[#allocation2] sm:$0x1]
    %v47 = vmul.f32 %v45, %v45
    %v48 = vrot.slane %v47, 4
    %v49 = vadd.f32 %v47, %v48
    %v50 = vrot.slane %v49, 2
    %v51 = vadd.f32 %v49, %v50
    %v52 = vrot.slane %v51, 1
    %v53 = vadd.f32 %v51, %v52
    %v54 = vadd.f32 %v46, %v53
    %55 = vst [vmem:[#allocation2] sm:$0x1] %v54
    // Predicated region
    $region14: #{tpu_custom_call.1} parent=1 // pred_check
      %p56 = pneg %p23
    $region15: #{tpu_custom_call.1} parent=1 // pred_check_branch
      %58 = sbr.rel (%p56) target = $region17
    $region16: #{tpu_custom_call.1} parent=1 // pred_region
      %v59 = vld [vmem:[#allocation2] sm:$0x1]
      %vm60 = vcmask 1040384
      %v61 = vsel %vm60, %v59, 0.0
      %62 = vadd.xlane.f32.xlu0 %v61
      %v63 = vpop.xlane.xlu0 %62
      %v64 = vrot.slane %v63, 4
      %v65 = vadd.f32 %v63, %v64
      %v66 = vrot.slane %v65, 2
      %v67 = vadd.f32 %v65, %v66
      %v68 = vrot.slane %v67, 1
      %v69 = vadd.f32 %v67, %v68
      %s70 = vtos %v69
      %s71 = smul.f32 %s70, 0.03125
      %v72 = vstv %s71
      %vm73 = vcmask 0
      %74 = vst.msk [vmem:[#allocation6] sm:$0x1] %vm73, %v72
    $region17: #{tpu_custom_call.1} parent=1 // pred_fallthru
      _
    // Predicated region
    $region18: #{tpu_custom_call.1} parent=1 // pred_check
      _
    $region19: #{tpu_custom_call.1} parent=1 // pred_check_branch
      %76 = sbr.rel (0) target = $region21
    $region20: #{tpu_custom_call.1} parent=1 // pred_region
      %s78 = ssub.s32 16, 16
      %79 = vsyncadd [#allocation5], %s78
      %s81 = sshll.u32 [#allocation6], 4
      %s82 = int_to_ptr.vmem [resolvable:$true] %s81
      %84 = dma.vmem_to_hbm [thread:$0]  %s82, 16, %s1, [#allocation5]
    $region21: #{tpu_custom_call.1} parent=1 // pred_fallthru
      _
    // Predicated region
    $region22: #{tpu_custom_call.1} parent=1 // pred_check
      _
    $region23: #{tpu_custom_call.1} parent=1 // pred_check_branch
      %86 = sbr.rel (0) target = $region25
    $region24: #{tpu_custom_call.1} parent=1 // pred_region
      %87 = dma.done [#allocation5], 16
    $region25: #{tpu_custom_call.1} parent=1 // pred_fallthru
      _
    %88 = vsyncpa [#allocation4], 1
    %89 = vsyncpa [#allocation5], 1

</llo_original>
